<compile_context>
chip_gen: v6e
topology: v6e:2x2x1
jax: 0.10.0
libtpu: 0.0.40
codegen_flags: <defaults>
</compile_context>

<pallas_src>
import functools

import jax
import jax.numpy as jnp
from jax import lax
from jax.experimental import pallas as pl
from jax.experimental.pallas import tpu as pltpu


def _round_up(x, m):
    return (x + m - 1) // m * m


def _vmem_capacity_bytes():
    try:
        return int(pltpu.get_tpu_info().vmem_capacity_bytes)
    except Exception:
        return 64 * 1024 * 1024  # conservative fallback (v7x per-TC)


def _pick_b_tile(Bp, cap=128):
    # Bp is a multiple of 8; Bt must stay a multiple of 8 and divide Bp.
    if Bp <= cap:
        return Bp
    c = (cap // 8) * 8
    while Bp % c:
        c -= 8
    return max(c, 8)


def _pick_n_tile(Np, single_batch_block):
    # Nt must be a multiple of 128 dividing Np.  When the batch axis gives a
    # single block, prefer >=2 N blocks so the 2nd TensorCore (v7x) has work.
    cap = 512
    if single_batch_block and Np >= 256:
        cap = min(cap, Np // 2)
    cands = [c for c in range(128, Np + 1, 128) if Np % c == 0 and c <= cap]
    return max(cands) if cands else Np


def _vmem_cost(Bt, Ip, Nt, t_steps):
    # fixed residents: W.T (2 bufs) + 4 param rows (2 bufs) + v,r outs (2 bufs)
    fixed = 2 * Ip * Nt * 4 + 8 * Nt * 4 + 4 * Bt * Nt * 4
    # per time step: x block (bf16, 2 bufs) + spikes block (bf16, 2 bufs)
    #                + psp scratch / dot temporary (f32)
    per_t = 2 * Bt * Ip * 2 + 2 * Bt * Nt * 2 + 2 * Bt * Nt * 4
    return fixed, per_t, fixed + t_steps * per_t


def _pick_t_tile(T, Bt, Ip, Nt, vmem_cap):
    t_cap = 128 if vmem_cap >= 96 * 1024 * 1024 else 64
    fixed, per_t, _ = _vmem_cost(Bt, Ip, Nt, 0)
    budget = int(vmem_cap * 0.55)
    tt = (budget - fixed) // per_t
    tt = max(1, min(tt, t_cap, T))
    if tt >= 8:
        tt = (tt // 8) * 8
    return tt


def _snn_kernel(x_ref, wT_ref, b_ref, dv_ref, rd_ref, rv_ref,
                spikes_ref, v_ref, r_ref, psp_sc,
                *, membrane_filter: bool, t_total: int, t_tile: int,
                has_tail: bool, unroll):
    Tt, Bt, Ip = x_ref.shape
    Nt = wT_ref.shape[1]
    t_idx = pl.program_id(2)

    # Zero the (VMEM-resident) state at the start of each (batch, N) block's
    # time sweep; v_ref / r_ref have a t-invariant index_map so they stay
    # resident across the whole sweep and are only written back at the end.
    @pl.when(t_idx == 0)
    def _():
        v_ref[...] = jnp.zeros_like(v_ref)
        r_ref[...] = jnp.zeros_like(r_ref)

    # Hoisted matmul: all Tt steps of this chunk in one MXU launch
    # (M = Tt*Bt).  x arrives as bf16 (exact 0/1), W stays f32 for bit parity
    # with the reference; result lands in an explicit VMEM scratch so the
    # recurrence can index it dynamically.
    x = x_ref[...].astype(jnp.float32).reshape(Tt * Bt, Ip)
    psp_sc[...] = jnp.dot(
        x, wT_ref[...], preferred_element_type=jnp.float32
    ).reshape(Tt, Bt, Nt)

    # (1, Nt) parameter rows; broadcast against (Bt, Nt) inside the VPU ops.
    b = b_ref[...]
    dv = dv_ref[...]
    rd = rd_ref[...]
    rv = rv_ref[...]
    base = t_idx * t_tile

    def step(t, carry):
        v, r = carry
        psp_t = psp_sc[t] + b                     # bias folded into the step
        if membrane_filter:
            cur_v = v * dv + psp_t - r
        else:
            cur_v = psp_t - r
        # max(0, sign(v - 1)) == (v > 1): one compare+select.
        spike = jnp.where(cur_v > 1.0, 1.0, 0.0)
        new_r = r * rd + spike * rv
        if has_tail:
            valid = (base + t) < t_total          # mask padded time steps
            cur_v = jnp.where(valid, cur_v, v)
            new_r = jnp.where(valid, new_r, r)
        spikes_ref[t] = spike.astype(spikes_ref.dtype)   # lane-dense store
        return cur_v, new_r

    v, r = lax.fori_loop(0, Tt, step, (v_ref[...], r_ref[...]), unroll=unroll)
    v_ref[...] = v
    r_ref[...] = r


def neuron_layer_forward(x, weight, bias, decay_v, reset_decay, reset_v,
                         membrane_filter=True):
    """x: [batch, input_size, step_num] (PyTorch convention)
       weight: [neuron_number, input_size] (nn.Linear weight)
       bias:   [neuron_number] or None
       returns (spikes [batch, neuron_number, step_num],
                (v, reset) each [batch, neuron_number])"""
    B, I, T = x.shape
    N = weight.shape[0]

    # Pad to TPU-friendly tiles: lanes (last dim) multiple of 128, sublanes
    # multiple of 8.  Padded rows/cols are zero and sliced off afterwards.
    Bp = _round_up(B, 8)
    Ip = _round_up(I, 128)
    Np = _round_up(N, 128)

    vmem_cap = _vmem_capacity_bytes()
    Bt = _pick_b_tile(Bp)
    Nt = _pick_n_tile(Np, single_batch_block=(Bp == Bt))
    Tt = _pick_t_tile(T, Bt, Ip, Nt, vmem_cap)
    Tp = _round_up(T, Tt)
    has_tail = (Tp != T)
    unroll = 8 if Tt % 8 == 0 else (4 if Tt % 4 == 0 else True)

    # Time-major padded input, shipped as bf16 (0/1 spike values are exact);
    # pad + cast fuse into the same XLA transpose pass.
    # TODO(synk): accept/emit time-major layouts to drop these wrapper passes.
    x_tbi = jnp.transpose(x, (2, 0, 1)).astype(jnp.bfloat16)
    x_tbi = jnp.pad(x_tbi, ((0, Tp - T), (0, Bp - B), (0, Ip - I)))

    # W.T padded to [Ip, Np]; zero padding contributes 0 to the contraction.
    wT = jnp.zeros((Ip, Np), jnp.float32).at[:I, :N].set(
        jnp.transpose(weight).astype(jnp.float32))

    def pad_row(p):
        row = jnp.zeros((1, Np), jnp.float32)
        if p is not None:
            row = row.at[0, :N].set(p.astype(jnp.float32))
        return row

    b_row = pad_row(bias)
    dv_row = pad_row(decay_v)
    rd_row = pad_row(reset_decay)
    rv_row = pad_row(reset_v)

    grid = (Bp // Bt, Np // Nt, Tp // Tt)

    _, _, needed = _vmem_cost(Bt, Ip, Nt, Tt)
    vmem_limit = int(min(max(needed * 1.3 + (4 << 20), 16 << 20),
                         vmem_cap * 0.9))

    kernel = functools.partial(
        _snn_kernel, membrane_filter=membrane_filter, t_total=T, t_tile=Tt,
        has_tail=has_tail, unroll=unroll)

    spikes_tbn, v_pad, r_pad = pl.pallas_call(
        kernel,
        out_shape=(jax.ShapeDtypeStruct((Tp, Bp, Np), jnp.bfloat16),
                   jax.ShapeDtypeStruct((Bp, Np), jnp.float32),
                   jax.ShapeDtypeStruct((Bp, Np), jnp.float32)),
        grid_spec=pltpu.PrefetchScalarGridSpec(
            num_scalar_prefetch=0,
            grid=grid,
            in_specs=[
                pl.BlockSpec((Tt, Bt, Ip), lambda b, n, t: (t, b, 0)),  # x
                pl.BlockSpec((Ip, Nt), lambda b, n, t: (0, n)),         # W.T
                pl.BlockSpec((1, Nt), lambda b, n, t: (0, n)),          # bias
                pl.BlockSpec((1, Nt), lambda b, n, t: (0, n)),          # decay_v
                pl.BlockSpec((1, Nt), lambda b, n, t: (0, n)),          # reset_decay
                pl.BlockSpec((1, Nt), lambda b, n, t: (0, n)),          # reset_v
            ],
            out_specs=(
                pl.BlockSpec((Tt, Bt, Nt), lambda b, n, t: (t, b, n)),  # spikes
                pl.BlockSpec((Bt, Nt), lambda b, n, t: (b, n)),         # final v
                pl.BlockSpec((Bt, Nt), lambda b, n, t: (b, n)),         # final r
            ),
            scratch_shapes=[pltpu.VMEM((Tt, Bt, Nt), jnp.float32)],      # psp
        ),
        compiler_params=pltpu.CompilerParams(
            dimension_semantics=("parallel", "parallel", "arbitrary"),
            vmem_limit_bytes=vmem_limit),
    )(x_tbi, wT, b_row, dv_row, rd_row, rv_row)

    # Slice padding, cast spikes back to f32 (exact), return PyTorch [B, N, T].
    spikes = jnp.transpose(spikes_tbn[:T, :B, :N].astype(jnp.float32),
                           (1, 2, 0))
    v = v_pad[:B, :N]
    r = r_pad[:B, :N]
    return spikes, (v, r)


def _ref_forward(x, weight, bias, decay_v, reset_decay, reset_v,
                 membrane_filter=True):
    """Pure-JAX reference mirroring the PyTorch loop."""
    B, I, T = x.shape
    N = weight.shape[0]
    v = jnp.zeros((N,), jnp.float32)
    r = jnp.zeros((N,), jnp.float32)
    spikes = []
    for t in range(T):
        psp = x[:, :, t] @ weight.T
        if bias is not None:
            psp = psp + bias
        cur_v = (v * decay_v + psp - r) if membrane_filter else (psp - r)
        spike = jnp.maximum(0.0, jnp.sign(cur_v - 1.0))
        r = r * reset_decay + spike * reset_v
        v = cur_v
        spikes.append(spike)
    return jnp.stack(spikes, axis=-1), (v, r)


if __name__ == "__main__":
    # module hyperparameters
    batch = 2
    input_size = 32
    neuron_number = 32
    step_num = 8
    tau_m = 4.0
    reset_v_val = 1.0
    membrane_filter = True
    train_bias = True

    key = jax.random.PRNGKey(0)
    k_x, k_w, k_b = jax.random.split(key, 3)

    # deterministic parameter init (xavier-uniform-like for the Linear weight)
    bound = (6.0 / (input_size + neuron_number)) ** 0.5
    weight = jax.random.uniform(k_w, (neuron_number, input_size),
                                jnp.float32, -bound, bound)
    bias = (jax.random.uniform(k_b, (neuron_number,), jnp.float32, -0.1, 0.1)
            if train_bias else None)
    decay_v = jnp.full((neuron_number,), jnp.exp(-1.0 / tau_m), jnp.float32)
    reset_decay = jnp.full((neuron_number,), jnp.exp(-1.0 / tau_m), jnp.float32)
    reset_v = jnp.full((neuron_number,), reset_v_val, jnp.float32)

    # binary input spike train [batch, input_size, step_num]
    x = (jax.random.uniform(k_x, (batch, input_size, step_num)) > 0.5
         ).astype(jnp.float32)

    spikes, (v_state, r_state) = neuron_layer_forward(
        x, weight, bias, decay_v, reset_decay, reset_v,
        membrane_filter=membrane_filter)
    jax.block_until_ready((spikes, v_state, r_state))

    ref_spikes, (ref_v, ref_r) = _ref_forward(
        x, weight, bias, decay_v, reset_decay, reset_v,
        membrane_filter=membrane_filter)

    assert spikes.shape == (batch, neuron_number, step_num)
    assert v_state.shape == (batch, neuron_number)
    assert r_state.shape == (batch, neuron_number)
    assert jnp.allclose(spikes, ref_spikes, atol=1e-5)
    assert jnp.allclose(v_state, ref_v, atol=1e-5)
    assert jnp.allclose(r_state, ref_r, atol=1e-5)

    print("KERNEL_OK")
</pallas_src>

<mosaic_0001>
module attributes {stable_mosaic.version = 11 : i64} {
  func.func @_snn_kernel(%arg0: i32, %arg1: i32, %arg2: i32, %arg3: memref<8x8x128xbf16, #tpu.memory_space<vmem>>, %arg4: memref<128x128xf32, #tpu.memory_space<vmem>>, %arg5: memref<1x128xf32, #tpu.memory_space<vmem>>, %arg6: memref<1x128xf32, #tpu.memory_space<vmem>>, %arg7: memref<1x128xf32, #tpu.memory_space<vmem>>, %arg8: memref<1x128xf32, #tpu.memory_space<vmem>>, %arg9: memref<8x8x128xbf16, #tpu.memory_space<vmem>>, %arg10: memref<8x128xf32, #tpu.memory_space<vmem>>, %arg11: memref<8x128xf32, #tpu.memory_space<vmem>>, %arg12: memref<8x8x128xf32, #tpu.memory_space<vmem>>) attributes {dimension_semantics = [#tpu.dimension_semantics<parallel>, #tpu.dimension_semantics<parallel>, #tpu.dimension_semantics<arbitrary>], iteration_bounds = array<i64: 1, 1, 1>, scalar_prefetch = 0 : i64, scratch_operands = 1 : i64, tpu.core_type = #tpu.core_type<tc>, window_params = [{transform_indices = @transform_0, window_bounds = array<i64: 8, 8, 128>}, {transform_indices = @transform_1, window_bounds = array<i64: 128, 128>}, {transform_indices = @transform_2, window_bounds = array<i64: 1, 128>}, {transform_indices = @transform_3, window_bounds = array<i64: 1, 128>}, {transform_indices = @transform_4, window_bounds = array<i64: 1, 128>}, {transform_indices = @transform_5, window_bounds = array<i64: 1, 128>}, {transform_indices = @transform_6, window_bounds = array<i64: 8, 8, 128>}, {transform_indices = @transform_7, window_bounds = array<i64: 8, 128>}, {transform_indices = @transform_8, window_bounds = array<i64: 8, 128>}]} {
    %c0_i32 = arith.constant 0 : i32
    %0 = arith.cmpi eq, %arg2, %c0_i32 : i32
    %1 = arith.extui %0 : i1 to i32
    %c0_i32_0 = arith.constant 0 : i32
    %2 = arith.cmpi ne, %1, %c0_i32_0 : i32
    scf.if %2 {
      %cst_81 = arith.constant 0.000000e+00 : f32
      %210 = vector.broadcast %cst_81 : f32 to vector<8x128xf32>
      %c0_82 = arith.constant 0 : index
      %c0_83 = arith.constant 0 : index
      %211 = vector.load %arg10[%c0_82, %c0_83] : memref<8x128xf32, #tpu.memory_space<vmem>>, vector<8x128xf32>
      tpu.vector_store %arg10[%c0_82, %c0_83], %210 {strides = array<i32>} : memref<8x128xf32, #tpu.memory_space<vmem>>, vector<8x128xf32>,
      %cst_84 = arith.constant 0.000000e+00 : f32
      %212 = vector.broadcast %cst_84 : f32 to vector<8x128xf32>
      %c0_85 = arith.constant 0 : index
      %c0_86 = arith.constant 0 : index
      %213 = vector.load %arg11[%c0_85, %c0_86] : memref<8x128xf32, #tpu.memory_space<vmem>>, vector<8x128xf32>
      tpu.vector_store %arg11[%c0_85, %c0_86], %212 {strides = array<i32>} : memref<8x128xf32, #tpu.memory_space<vmem>>, vector<8x128xf32>,
    } else {
    }
    %c0 = arith.constant 0 : index
    %c0_1 = arith.constant 0 : index
    %c0_2 = arith.constant 0 : index
    %3 = vector.load %arg3[%c0, %c0_1, %c0_2] : memref<8x8x128xbf16, #tpu.memory_space<vmem>>, vector<8x8x128xbf16>
    %4 = arith.extf %3 : vector<8x8x128xbf16> to vector<8x8x128xf32>
    %5 = vector.shape_cast %4 : vector<8x8x128xf32> to vector<64x128xf32>
    %c0_3 = arith.constant 0 : index
    %c0_4 = arith.constant 0 : index
    %6 = vector.load %arg4[%c0_3, %c0_4] : memref<128x128xf32, #tpu.memory_space<vmem>>, vector<128x128xf32>
    %cst = arith.constant dense<0.000000e+00> : vector<64x128xf32>
    %7 = tpu.matmul %5, %6, %cst {dimension_numbers = #tpu.dot_dimension_numbers<[1], [0], [0], [1], [0, 0, 1, 1], [], []>} : vector<64x128xf32>, vector<128x128xf32>, vector<64x128xf32> -> vector<64x128xf32>
    %8 = vector.shape_cast %7 : vector<64x128xf32> to vector<8x8x128xf32>
    %c0_5 = arith.constant 0 : index
    %c0_6 = arith.constant 0 : index
    %c0_7 = arith.constant 0 : index
    %9 = vector.load %arg12[%c0_5, %c0_6, %c0_7] : memref<8x8x128xf32, #tpu.memory_space<vmem>>, vector<8x8x128xf32>
    tpu.vector_store %arg12[%c0_5, %c0_6, %c0_7], %8 {strides = array<i32>} : memref<8x8x128xf32, #tpu.memory_space<vmem>>, vector<8x8x128xf32>,
    %c0_8 = arith.constant 0 : index
    %c0_9 = arith.constant 0 : index
    %10 = vector.load %arg5[%c0_8, %c0_9] : memref<1x128xf32, #tpu.memory_space<vmem>>, vector<1x128xf32>
    %c0_10 = arith.constant 0 : index
    %c0_11 = arith.constant 0 : index
    %11 = vector.load %arg6[%c0_10, %c0_11] : memref<1x128xf32, #tpu.memory_space<vmem>>, vector<1x128xf32>
    %c0_12 = arith.constant 0 : index
    %c0_13 = arith.constant 0 : index
    %12 = vector.load %arg7[%c0_12, %c0_13] : memref<1x128xf32, #tpu.memory_space<vmem>>, vector<1x128xf32>
    %c0_14 = arith.constant 0 : index
    %c0_15 = arith.constant 0 : index
    %13 = vector.load %arg8[%c0_14, %c0_15] : memref<1x128xf32, #tpu.memory_space<vmem>>, vector<1x128xf32>
    %c0_16 = arith.constant 0 : index
    %c0_17 = arith.constant 0 : index
    %14 = vector.load %arg10[%c0_16, %c0_17] : memref<8x128xf32, #tpu.memory_space<vmem>>, vector<8x128xf32>
    %c0_18 = arith.constant 0 : index
    %c0_19 = arith.constant 0 : index
    %15 = vector.load %arg11[%c0_18, %c0_19] : memref<8x128xf32, #tpu.memory_space<vmem>>, vector<8x128xf32>
    %c0_i32_20 = arith.constant 0 : i32
    %16 = arith.index_cast %c0_i32_20 : i32 to index
    %c0_21 = arith.constant 0 : index
    %c0_22 = arith.constant 0 : index
    %17 = vector.load %arg12[%16, %c0_21, %c0_22] : memref<8x8x128xf32, #tpu.memory_space<vmem>>, vector<1x8x128xf32>
    %18 = vector.shape_cast %17 : vector<1x8x128xf32> to vector<8x128xf32>
    %19 = vector.broadcast %10 : vector<1x128xf32> to vector<8x128xf32>
    %20 = arith.addf %18, %19 : vector<8x128xf32>
    %21 = vector.broadcast %11 : vector<1x128xf32> to vector<8x128xf32>
    %22 = arith.mulf %14, %21 : vector<8x128xf32>
    %23 = arith.addf %22, %20 : vector<8x128xf32>
    %24 = arith.subf %23, %15 : vector<8x128xf32>
    %cst_23 = arith.constant 1.000000e+00 : f32
    %25 = vector.broadcast %cst_23 : f32 to vector<8x128xf32>
    %26 = arith.cmpf ogt, %24, %25 : vector<8x128xf32>
    %cst_24 = arith.constant 1.000000e+00 : f32
    %cst_25 = arith.constant 0.000000e+00 : f32
    %27 = vector.broadcast %cst_24 : f32 to vector<8x128xf32>
    %28 = vector.broadcast %cst_25 : f32 to vector<8x128xf32>
    %29 = arith.select %26, %27, %28 : vector<8x128xi1>, vector<8x128xf32>
    %30 = vector.broadcast %12 : vector<1x128xf32> to vector<8x128xf32>
    %31 = arith.mulf %15, %30 : vector<8x128xf32>
    %32 = vector.broadcast %13 : vector<1x128xf32> to vector<8x128xf32>
    %33 = arith.mulf %29, %32 : vector<8x128xf32>
    %34 = arith.addf %31, %33 : vector<8x128xf32>
    %35 = arith.truncf %29 : vector<8x128xf32> to vector<8x128xbf16>
    %36 = arith.index_cast %c0_i32_20 : i32 to index
    %c0_26 = arith.constant 0 : index
    %c0_27 = arith.constant 0 : index
    %37 = vector.load %arg9[%36, %c0_26, %c0_27] : memref<8x8x128xbf16, #tpu.memory_space<vmem>>, vector<1x8x128xbf16>
    %38 = vector.shape_cast %37 : vector<1x8x128xbf16> to vector<8x128xbf16>
    %39 = vector.shape_cast %35 : vector<8x128xbf16> to vector<1x8x128xbf16>
    tpu.vector_store %arg9[%36, %c0_26, %c0_27], %39 {strides = array<i32>} : memref<8x8x128xbf16, #tpu.memory_space<vmem>>, vector<1x8x128xbf16>,
    %c1_i32 = arith.constant 1 : i32
    %40 = arith.index_cast %c1_i32 : i32 to index
    %c0_28 = arith.constant 0 : index
    %c0_29 = arith.constant 0 : index
    %41 = vector.load %arg12[%40, %c0_28, %c0_29] : memref<8x8x128xf32, #tpu.memory_space<vmem>>, vector<1x8x128xf32>
    %42 = vector.shape_cast %41 : vector<1x8x128xf32> to vector<8x128xf32>
    %43 = vector.broadcast %10 : vector<1x128xf32> to vector<8x128xf32>
    %44 = arith.addf %42, %43 : vector<8x128xf32>
    %45 = vector.broadcast %11 : vector<1x128xf32> to vector<8x128xf32>
    %46 = arith.mulf %24, %45 : vector<8x128xf32>
    %47 = arith.addf %46, %44 : vector<8x128xf32>
    %48 = arith.subf %47, %34 : vector<8x128xf32>
    %cst_30 = arith.constant 1.000000e+00 : f32
    %49 = vector.broadcast %cst_30 : f32 to vector<8x128xf32>
    %50 = arith.cmpf ogt, %48, %49 : vector<8x128xf32>
    %cst_31 = arith.constant 1.000000e+00 : f32
    %cst_32 = arith.constant 0.000000e+00 : f32
    %51 = vector.broadcast %cst_31 : f32 to vector<8x128xf32>
    %52 = vector.broadcast %cst_32 : f32 to vector<8x128xf32>
    %53 = arith.select %50, %51, %52 : vector<8x128xi1>, vector<8x128xf32>
    %54 = vector.broadcast %12 : vector<1x128xf32> to vector<8x128xf32>
    %55 = arith.mulf %34, %54 : vector<8x128xf32>
    %56 = vector.broadcast %13 : vector<1x128xf32> to vector<8x128xf32>
    %57 = arith.mulf %53, %56 : vector<8x128xf32>
    %58 = arith.addf %55, %57 : vector<8x128xf32>
    %59 = arith.truncf %53 : vector<8x128xf32> to vector<8x128xbf16>
    %60 = arith.index_cast %c1_i32 : i32 to index
    %c0_33 = arith.constant 0 : index
    %c0_34 = arith.constant 0 : index
    %61 = vector.load %arg9[%60, %c0_33, %c0_34] : memref<8x8x128xbf16, #tpu.memory_space<vmem>>, vector<1x8x128xbf16>
    %62 = vector.shape_cast %61 : vector<1x8x128xbf16> to vector<8x128xbf16>
    %63 = vector.shape_cast %59 : vector<8x128xbf16> to vector<1x8x128xbf16>
    tpu.vector_store %arg9[%60, %c0_33, %c0_34], %63 {strides = array<i32>} : memref<8x8x128xbf16, #tpu.memory_space<vmem>>, vector<1x8x128xbf16>,
    %c2_i32 = arith.constant 2 : i32
    %64 = arith.index_cast %c2_i32 : i32 to index
    %c0_35 = arith.constant 0 : index
    %c0_36 = arith.constant 0 : index
    %65 = vector.load %arg12[%64, %c0_35, %c0_36] : memref<8x8x128xf32, #tpu.memory_space<vmem>>, vector<1x8x128xf32>
    %66 = vector.shape_cast %65 : vector<1x8x128xf32> to vector<8x128xf32>
    %67 = vector.broadcast %10 : vector<1x128xf32> to vector<8x128xf32>
    %68 = arith.addf %66, %67 : vector<8x128xf32>
    %69 = vector.broadcast %11 : vector<1x128xf32> to vector<8x128xf32>
    %70 = arith.mulf %48, %69 : vector<8x128xf32>
    %71 = arith.addf %70, %68 : vector<8x128xf32>
    %72 = arith.subf %71, %58 : vector<8x128xf32>
    %cst_37 = arith.constant 1.000000e+00 : f32
    %73 = vector.broadcast %cst_37 : f32 to vector<8x128xf32>
    %74 = arith.cmpf ogt, %72, %73 : vector<8x128xf32>
    %cst_38 = arith.constant 1.000000e+00 : f32
    %cst_39 = arith.constant 0.000000e+00 : f32
    %75 = vector.broadcast %cst_38 : f32 to vector<8x128xf32>
    %76 = vector.broadcast %cst_39 : f32 to vector<8x128xf32>
    %77 = arith.select %74, %75, %76 : vector<8x128xi1>, vector<8x128xf32>
    %78 = vector.broadcast %12 : vector<1x128xf32> to vector<8x128xf32>
    %79 = arith.mulf %58, %78 : vector<8x128xf32>
    %80 = vector.broadcast %13 : vector<1x128xf32> to vector<8x128xf32>
    %81 = arith.mulf %77, %80 : vector<8x128xf32>
    %82 = arith.addf %79, %81 : vector<8x128xf32>
    %83 = arith.truncf %77 : vector<8x128xf32> to vector<8x128xbf16>
    %84 = arith.index_cast %c2_i32 : i32 to index
    %c0_40 = arith.constant 0 : index
    %c0_41 = arith.constant 0 : index
    %85 = vector.load %arg9[%84, %c0_40, %c0_41] : memref<8x8x128xbf16, #tpu.memory_space<vmem>>, vector<1x8x128xbf16>
    %86 = vector.shape_cast %85 : vector<1x8x128xbf16> to vector<8x128xbf16>
    %87 = vector.shape_cast %83 : vector<8x128xbf16> to vector<1x8x128xbf16>
    tpu.vector_store %arg9[%84, %c0_40, %c0_41], %87 {strides = array<i32>} : memref<8x8x128xbf16, #tpu.memory_space<vmem>>, vector<1x8x128xbf16>,
    %c3_i32 = arith.constant 3 : i32
    %88 = arith.index_cast %c3_i32 : i32 to index
    %c0_42 = arith.constant 0 : index
    %c0_43 = arith.constant 0 : index
    %89 = vector.load %arg12[%88, %c0_42, %c0_43] : memref<8x8x128xf32, #tpu.memory_space<vmem>>, vector<1x8x128xf32>
    %90 = vector.shape_cast %89 : vector<1x8x128xf32> to vector<8x128xf32>
    %91 = vector.broadcast %10 : vector<1x128xf32> to vector<8x128xf32>
    %92 = arith.addf %90, %91 : vector<8x128xf32>
    %93 = vector.broadcast %11 : vector<1x128xf32> to vector<8x128xf32>
    %94 = arith.mulf %72, %93 : vector<8x128xf32>
    %95 = arith.addf %94, %92 : vector<8x128xf32>
    %96 = arith.subf %95, %82 : vector<8x128xf32>
    %cst_44 = arith.constant 1.000000e+00 : f32
    %97 = vector.broadcast %cst_44 : f32 to vector<8x128xf32>
    %98 = arith.cmpf ogt, %96, %97 : vector<8x128xf32>
    %cst_45 = arith.constant 1.000000e+00 : f32
    %cst_46 = arith.constant 0.000000e+00 : f32
    %99 = vector.broadcast %cst_45 : f32 to vector<8x128xf32>
    %100 = vector.broadcast %cst_46 : f32 to vector<8x128xf32>
    %101 = arith.select %98, %99, %100 : vector<8x128xi1>, vector<8x128xf32>
    %102 = vector.broadcast %12 : vector<1x128xf32> to vector<8x128xf32>
    %103 = arith.mulf %82, %102 : vector<8x128xf32>
    %104 = vector.broadcast %13 : vector<1x128xf32> to vector<8x128xf32>
    %105 = arith.mulf %101, %104 : vector<8x128xf32>
    %106 = arith.addf %103, %105 : vector<8x128xf32>
    %107 = arith.truncf %101 : vector<8x128xf32> to vector<8x128xbf16>
    %108 = arith.index_cast %c3_i32 : i32 to index
    %c0_47 = arith.constant 0 : index
    %c0_48 = arith.constant 0 : index
    %109 = vector.load %arg9[%108, %c0_47, %c0_48] : memref<8x8x128xbf16, #tpu.memory_space<vmem>>, vector<1x8x128xbf16>
    %110 = vector.shape_cast %109 : vector<1x8x128xbf16> to vector<8x128xbf16>
    %111 = vector.shape_cast %107 : vector<8x128xbf16> to vector<1x8x128xbf16>
    tpu.vector_store %arg9[%108, %c0_47, %c0_48], %111 {strides = array<i32>} : memref<8x8x128xbf16, #tpu.memory_space<vmem>>, vector<1x8x128xbf16>,
    %c4_i32 = arith.constant 4 : i32
    %112 = arith.index_cast %c4_i32 : i32 to index
    %c0_49 = arith.constant 0 : index
    %c0_50 = arith.constant 0 : index
    %113 = vector.load %arg12[%112, %c0_49, %c0_50] : memref<8x8x128xf32, #tpu.memory_space<vmem>>, vector<1x8x128xf32>
    %114 = vector.shape_cast %113 : vector<1x8x128xf32> to vector<8x128xf32>
    %115 = vector.broadcast %10 : vector<1x128xf32> to vector<8x128xf32>
    %116 = arith.addf %114, %115 : vector<8x128xf32>
    %117 = vector.broadcast %11 : vector<1x128xf32> to vector<8x128xf32>
    %118 = arith.mulf %96, %117 : vector<8x128xf32>
    %119 = arith.addf %118, %116 : vector<8x128xf32>
    %120 = arith.subf %119, %106 : vector<8x128xf32>
    %cst_51 = arith.constant 1.000000e+00 : f32
    %121 = vector.broadcast %cst_51 : f32 to vector<8x128xf32>
    %122 = arith.cmpf ogt, %120, %121 : vector<8x128xf32>
    %cst_52 = arith.constant 1.000000e+00 : f32
    %cst_53 = arith.constant 0.000000e+00 : f32
    %123 = vector.broadcast %cst_52 : f32 to vector<8x128xf32>
    %124 = vector.broadcast %cst_53 : f32 to vector<8x128xf32>
    %125 = arith.select %122, %123, %124 : vector<8x128xi1>, vector<8x128xf32>
    %126 = vector.broadcast %12 : vector<1x128xf32> to vector<8x128xf32>
    %127 = arith.mulf %106, %126 : vector<8x128xf32>
    %128 = vector.broadcast %13 : vector<1x128xf32> to vector<8x128xf32>
    %129 = arith.mulf %125, %128 : vector<8x128xf32>
    %130 = arith.addf %127, %129 : vector<8x128xf32>
    %131 = arith.truncf %125 : vector<8x128xf32> to vector<8x128xbf16>
    %132 = arith.index_cast %c4_i32 : i32 to index
    %c0_54 = arith.constant 0 : index
    %c0_55 = arith.constant 0 : index
    %133 = vector.load %arg9[%132, %c0_54, %c0_55] : memref<8x8x128xbf16, #tpu.memory_space<vmem>>, vector<1x8x128xbf16>
    %134 = vector.shape_cast %133 : vector<1x8x128xbf16> to vector<8x128xbf16>
    %135 = vector.shape_cast %131 : vector<8x128xbf16> to vector<1x8x128xbf16>
    tpu.vector_store %arg9[%132, %c0_54, %c0_55], %135 {strides = array<i32>} : memref<8x8x128xbf16, #tpu.memory_space<vmem>>, vector<1x8x128xbf16>,
    %c5_i32 = arith.constant 5 : i32
    %136 = arith.index_cast %c5_i32 : i32 to index
    %c0_56 = arith.constant 0 : index
    %c0_57 = arith.constant 0 : index
    %137 = vector.load %arg12[%136, %c0_56, %c0_57] : memref<8x8x128xf32, #tpu.memory_space<vmem>>, vector<1x8x128xf32>
    %138 = vector.shape_cast %137 : vector<1x8x128xf32> to vector<8x128xf32>
    %139 = vector.broadcast %10 : vector<1x128xf32> to vector<8x128xf32>
    %140 = arith.addf %138, %139 : vector<8x128xf32>
    %141 = vector.broadcast %11 : vector<1x128xf32> to vector<8x128xf32>
    %142 = arith.mulf %120, %141 : vector<8x128xf32>
    %143 = arith.addf %142, %140 : vector<8x128xf32>
    %144 = arith.subf %143, %130 : vector<8x128xf32>
    %cst_58 = arith.constant 1.000000e+00 : f32
    %145 = vector.broadcast %cst_58 : f32 to vector<8x128xf32>
    %146 = arith.cmpf ogt, %144, %145 : vector<8x128xf32>
    %cst_59 = arith.constant 1.000000e+00 : f32
    %cst_60 = arith.constant 0.000000e+00 : f32
    %147 = vector.broadcast %cst_59 : f32 to vector<8x128xf32>
    %148 = vector.broadcast %cst_60 : f32 to vector<8x128xf32>
    %149 = arith.select %146, %147, %148 : vector<8x128xi1>, vector<8x128xf32>
    %150 = vector.broadcast %12 : vector<1x128xf32> to vector<8x128xf32>
    %151 = arith.mulf %130, %150 : vector<8x128xf32>
    %152 = vector.broadcast %13 : vector<1x128xf32> to vector<8x128xf32>
    %153 = arith.mulf %149, %152 : vector<8x128xf32>
    %154 = arith.addf %151, %153 : vector<8x128xf32>
    %155 = arith.truncf %149 : vector<8x128xf32> to vector<8x128xbf16>
    %156 = arith.index_cast %c5_i32 : i32 to index
    %c0_61 = arith.constant 0 : index
    %c0_62 = arith.constant 0 : index
    %157 = vector.load %arg9[%156, %c0_61, %c0_62] : memref<8x8x128xbf16, #tpu.memory_space<vmem>>, vector<1x8x128xbf16>
    %158 = vector.shape_cast %157 : vector<1x8x128xbf16> to vector<8x128xbf16>
    %159 = vector.shape_cast %155 : vector<8x128xbf16> to vector<1x8x128xbf16>
    tpu.vector_store %arg9[%156, %c0_61, %c0_62], %159 {strides = array<i32>} : memref<8x8x128xbf16, #tpu.memory_space<vmem>>, vector<1x8x128xbf16>,
    %c6_i32 = arith.constant 6 : i32
    %160 = arith.index_cast %c6_i32 : i32 to index
    %c0_63 = arith.constant 0 : index
    %c0_64 = arith.constant 0 : index
    %161 = vector.load %arg12[%160, %c0_63, %c0_64] : memref<8x8x128xf32, #tpu.memory_space<vmem>>, vector<1x8x128xf32>
    %162 = vector.shape_cast %161 : vector<1x8x128xf32> to vector<8x128xf32>
    %163 = vector.broadcast %10 : vector<1x128xf32> to vector<8x128xf32>
    %164 = arith.addf %162, %163 : vector<8x128xf32>
    %165 = vector.broadcast %11 : vector<1x128xf32> to vector<8x128xf32>
    %166 = arith.mulf %144, %165 : vector<8x128xf32>
    %167 = arith.addf %166, %164 : vector<8x128xf32>
    %168 = arith.subf %167, %154 : vector<8x128xf32>
    %cst_65 = arith.constant 1.000000e+00 : f32
    %169 = vector.broadcast %cst_65 : f32 to vector<8x128xf32>
    %170 = arith.cmpf ogt, %168, %169 : vector<8x128xf32>
    %cst_66 = arith.constant 1.000000e+00 : f32
    %cst_67 = arith.constant 0.000000e+00 : f32
    %171 = vector.broadcast %cst_66 : f32 to vector<8x128xf32>
    %172 = vector.broadcast %cst_67 : f32 to vector<8x128xf32>
    %173 = arith.select %170, %171, %172 : vector<8x128xi1>, vector<8x128xf32>
    %174 = vector.broadcast %12 : vector<1x128xf32> to vector<8x128xf32>
    %175 = arith.mulf %154, %174 : vector<8x128xf32>
    %176 = vector.broadcast %13 : vector<1x128xf32> to vector<8x128xf32>
    %177 = arith.mulf %173, %176 : vector<8x128xf32>
    %178 = arith.addf %175, %177 : vector<8x128xf32>
    %179 = arith.truncf %173 : vector<8x128xf32> to vector<8x128xbf16>
    %180 = arith.index_cast %c6_i32 : i32 to index
    %c0_68 = arith.constant 0 : index
    %c0_69 = arith.constant 0 : index
    %181 = vector.load %arg9[%180, %c0_68, %c0_69] : memref<8x8x128xbf16, #tpu.memory_space<vmem>>, vector<1x8x128xbf16>
    %182 = vector.shape_cast %181 : vector<1x8x128xbf16> to vector<8x128xbf16>
    %183 = vector.shape_cast %179 : vector<8x128xbf16> to vector<1x8x128xbf16>
    tpu.vector_store %arg9[%180, %c0_68, %c0_69], %183 {strides = array<i32>} : memref<8x8x128xbf16, #tpu.memory_space<vmem>>, vector<1x8x128xbf16>,
    %c7_i32 = arith.constant 7 : i32
    %184 = arith.index_cast %c7_i32 : i32 to index
    %c0_70 = arith.constant 0 : index
    %c0_71 = arith.constant 0 : index
    %185 = vector.load %arg12[%184, %c0_70, %c0_71] : memref<8x8x128xf32, #tpu.memory_space<vmem>>, vector<1x8x128xf32>
    %186 = vector.shape_cast %185 : vector<1x8x128xf32> to vector<8x128xf32>
    %187 = vector.broadcast %10 : vector<1x128xf32> to vector<8x128xf32>
    %188 = arith.addf %186, %187 : vector<8x128xf32>
    %189 = vector.broadcast %11 : vector<1x128xf32> to vector<8x128xf32>
    %190 = arith.mulf %168, %189 : vector<8x128xf32>
    %191 = arith.addf %190, %188 : vector<8x128xf32>
    %192 = arith.subf %191, %178 : vector<8x128xf32>
    %cst_72 = arith.constant 1.000000e+00 : f32
    %193 = vector.broadcast %cst_72 : f32 to vector<8x128xf32>
    %194 = arith.cmpf ogt, %192, %193 : vector<8x128xf32>
    %cst_73 = arith.constant 1.000000e+00 : f32
    %cst_74 = arith.constant 0.000000e+00 : f32
    %195 = vector.broadcast %cst_73 : f32 to vector<8x128xf32>
    %196 = vector.broadcast %cst_74 : f32 to vector<8x128xf32>
    %197 = arith.select %194, %195, %196 : vector<8x128xi1>, vector<8x128xf32>
    %198 = vector.broadcast %12 : vector<1x128xf32> to vector<8x128xf32>
    %199 = arith.mulf %178, %198 : vector<8x128xf32>
    %200 = vector.broadcast %13 : vector<1x128xf32> to vector<8x128xf32>
    %201 = arith.mulf %197, %200 : vector<8x128xf32>
    %202 = arith.addf %199, %201 : vector<8x128xf32>
    %203 = arith.truncf %197 : vector<8x128xf32> to vector<8x128xbf16>
    %204 = arith.index_cast %c7_i32 : i32 to index
    %c0_75 = arith.constant 0 : index
    %c0_76 = arith.constant 0 : index
    %205 = vector.load %arg9[%204, %c0_75, %c0_76] : memref<8x8x128xbf16, #tpu.memory_space<vmem>>, vector<1x8x128xbf16>
    %206 = vector.shape_cast %205 : vector<1x8x128xbf16> to vector<8x128xbf16>
    %207 = vector.shape_cast %203 : vector<8x128xbf16> to vector<1x8x128xbf16>
    tpu.vector_store %arg9[%204, %c0_75, %c0_76], %207 {strides = array<i32>} : memref<8x8x128xbf16, #tpu.memory_space<vmem>>, vector<1x8x128xbf16>,
    %c8_i32 = arith.constant 8 : i32
    %c0_77 = arith.constant 0 : index
    %c0_78 = arith.constant 0 : index
    %208 = vector.load %arg10[%c0_77, %c0_78] : memref<8x128xf32, #tpu.memory_space<vmem>>, vector<8x128xf32>
    tpu.vector_store %arg10[%c0_77, %c0_78], %192 {strides = array<i32>} : memref<8x128xf32, #tpu.memory_space<vmem>>, vector<8x128xf32>,
    %c0_79 = arith.constant 0 : index
    %c0_80 = arith.constant 0 : index
    %209 = vector.load %arg11[%c0_79, %c0_80] : memref<8x128xf32, #tpu.memory_space<vmem>>, vector<8x128xf32>
    tpu.vector_store %arg11[%c0_79, %c0_80], %202 {strides = array<i32>} : memref<8x128xf32, #tpu.memory_space<vmem>>, vector<8x128xf32>,
    return
  }
  func.func @transform_0(%arg0: i32, %arg1: i32, %arg2: i32) -> (i32, i32, i32) {
    %c0_i32 = arith.constant 0 : i32
    %c0_i32_0 = arith.constant 0 : i32
    return %arg2, %arg0, %c0_i32 : i32, i32, i32
  }
  func.func @transform_1(%arg0: i32, %arg1: i32, %arg2: i32) -> (i32, i32) {
    %c0_i32 = arith.constant 0 : i32
    %c0_i32_0 = arith.constant 0 : i32
    return %c0_i32, %arg1 : i32, i32
  }
  func.func @transform_2(%arg0: i32, %arg1: i32, %arg2: i32) -> (i32, i32) {
    %c0_i32 = arith.constant 0 : i32
    %c0_i32_0 = arith.constant 0 : i32
    return %c0_i32, %arg1 : i32, i32
  }
  func.func @transform_3(%arg0: i32, %arg1: i32, %arg2: i32) -> (i32, i32) {
    %c0_i32 = arith.constant 0 : i32
    %c0_i32_0 = arith.constant 0 : i32
    return %c0_i32, %arg1 : i32, i32
  }
  func.func @transform_4(%arg0: i32, %arg1: i32, %arg2: i32) -> (i32, i32) {
    %c0_i32 = arith.constant 0 : i32
    %c0_i32_0 = arith.constant 0 : i32
    return %c0_i32, %arg1 : i32, i32
  }
  func.func @transform_5(%arg0: i32, %arg1: i32, %arg2: i32) -> (i32, i32) {
    %c0_i32 = arith.constant 0 : i32
    %c0_i32_0 = arith.constant 0 : i32
    return %c0_i32, %arg1 : i32, i32
  }
  func.func @transform_6(%arg0: i32, %arg1: i32, %arg2: i32) -> (i32, i32, i32) {
    %c0_i32 = arith.constant 0 : i32
    return %arg2, %arg0, %arg1 : i32, i32, i32
  }
  func.func @transform_7(%arg0: i32, %arg1: i32, %arg2: i32) -> (i32, i32) {
    %c0_i32 = arith.constant 0 : i32
    return %arg0, %arg1 : i32, i32
  }
  func.func @transform_8(%arg0: i32, %arg1: i32, %arg2: i32) -> (i32, i32) {
    %c0_i32 = arith.constant 0 : i32
    return %arg0, %arg1 : i32, i32
  }
}

</mosaic_0001>

<llo_original>
// kernel: tpu_custom_call.1
$region0: #{tpu_custom_call.1}
  #allocation0 [shape = 'u32[]', space=smem, size = 0x4, offset = 0x4, fixed_abs, tag = 'smem constant byte address 0x4 - core index']
  #allocation1 [shape = 'u32[144,128]{1,0:T(1,128)}', space=vmem, size = 0x12000, scoped, tag = 'internal scratch']
  #allocation2 [shape = 'f32[8,8,128]{2,1,0:T(8,128)}', space=vmem, size = 0x8000, scoped, tag = 'scratch operand']
  %s0 = inlined_call_operand.hbm [shape: bf16[8,8,128], index: 0, kind: input, shape index: {}]
  %s1 = inlined_call_operand.hbm [shape: f32[128,128], index: 1, kind: input, shape index: {}]
  %s2 = inlined_call_operand.vmem [shape: f32[1,128], index: 2, kind: input, shape index: {}]
  %s3 = inlined_call_operand.vmem [shape: f32[1,128], index: 3, kind: input, shape index: {}]
  %s4 = inlined_call_operand.vmem [shape: f32[1,128], index: 4, kind: input, shape index: {}]
  %s5 = inlined_call_operand.vmem [shape: f32[1,128], index: 5, kind: input, shape index: {}]
  %s6 = inlined_call_operand.hbm [shape: bf16[8,8,128], index: 6, kind: output, shape index: {0}]
  %s7 = inlined_call_operand.hbm [shape: f32[8,128], index: 7, kind: output, shape index: {1}]
  %s8 = inlined_call_operand.hbm [shape: f32[8,128], index: 8, kind: output, shape index: {2}]
  %9 = xla_tuple %s6, %s7, %s8
  %s10 = sld [smem:[#allocation0]]
  $region62: #{tpu_custom_call.1} parent=0
    _
  %s12 = ssub.s32 1, %s10
  %s13 = scalar_select 0, %s12, %s10
  $region1: #{tpu_custom_call.1} parent=0
    #allocation3 [shape = 'u8[16384]{0}', space=vmem, size = 0x4000, scoped, tag = 'input window, operand 0, single buffered']
    #allocation4 [shape = 's32[1]{0}', space=sflag, size = 0x4, scoped, tag = 'scoped memory for tpu_custom_call.1']
    #allocation5 [shape = 's32[1]{0}', space=sflag, size = 0x4, scoped, tag = 'scoped memory for tpu_custom_call.1']
    #allocation6 [shape = 'u8[65536]{0}', space=vmem, size = 0x10000, scoped, tag = 'input window, operand 1, single buffered']
    #allocation7 [shape = 's32[1]{0}', space=sflag, size = 0x4, scoped, tag = 'scoped memory for tpu_custom_call.1']
    #allocation8 [shape = 'u8[16384]{0}', space=vmem, size = 0x4000, scoped, tag = 'output window, operand 0, single buffered']
    #allocation9 [shape = 'u8[4096]{0}', space=vmem, size = 0x1000, scoped, tag = 'output window, operand 1, single buffered']
    #allocation10 [shape = 's32[1]{0}', space=sflag, size = 0x4, scoped, tag = 'scoped memory for tpu_custom_call.1']
    #allocation11 [shape = 'u8[4096]{0}', space=vmem, size = 0x1000, scoped, tag = 'output window, operand 2, single buffered']
    %14 = vsyncpa [#allocation4], 0
    %15 = vsyncpa [#allocation7], 0
    %16 = vsyncpa [#allocation5], 0
    %17 = vsyncpa [#allocation10], 0
    // Predicated region
    $region2: #{tpu_custom_call.1} parent=1 // pred_check
      _
    $region3: #{tpu_custom_call.1} parent=1 // pred_check_branch
      %19 = sbr.rel (0) target = $region5
    $region4: #{tpu_custom_call.1} parent=1 // pred_region
      %s21 = ssub.s32 512, 512
      %22 = vsyncadd [#allocation4], %s21
      %s23 = sshll.u32 [#allocation3], 4
      %s24 = int_to_ptr.vmem [resolvable:$true] %s23
      %29 = dma.hbm_to_vmem [thread:$0]  %s0, 512, %s24, [#allocation4], 64, 64, 4
    $region5: #{tpu_custom_call.1} parent=1 // pred_fallthru
      _
    // Predicated region
    $region6: #{tpu_custom_call.1} parent=1 // pred_check
      _
    $region7: #{tpu_custom_call.1} parent=1 // pred_check_branch
      %31 = sbr.rel (0) target = $region9
    $region8: #{tpu_custom_call.1} parent=1 // pred_region
      %s33 = ssub.s32 2048, 2048
      %34 = vsyncadd [#allocation7], %s33
      %s35 = sshll.u32 [#allocation6], 4
      %s36 = int_to_ptr.vmem [resolvable:$true] %s35
      %41 = dma.hbm_to_vmem [thread:$0]  %s1, 2048, %s36, [#allocation7], 128, 128, 8
    $region9: #{tpu_custom_call.1} parent=1 // pred_fallthru
      _
    // Predicated region
    $region10: #{tpu_custom_call.1} parent=1 // pred_check
      _
    $region11: #{tpu_custom_call.1} parent=1 // pred_check_branch
      %43 = sbr.rel (0) target = $region13
    $region12: #{tpu_custom_call.1} parent=1 // pred_region
      _
    $region13: #{tpu_custom_call.1} parent=1 // pred_fallthru
      _
    // Predicated region
    $region14: #{tpu_custom_call.1} parent=1 // pred_check
      _
    $region15: #{tpu_custom_call.1} parent=1 // pred_check_branch
      %45 = sbr.rel (0) target = $region17
    $region16: #{tpu_custom_call.1} parent=1 // pred_region
      _
    $region17: #{tpu_custom_call.1} parent=1 // pred_fallthru
      _
    // Predicated region
    $region18: #{tpu_custom_call.1} parent=1 // pred_check
      _
    $region19: #{tpu_custom_call.1} parent=1 // pred_check_branch
      %47 = sbr.rel (0) target = $region21
    $region20: #{tpu_custom_call.1} parent=1 // pred_region
      _
    $region21: #{tpu_custom_call.1} parent=1 // pred_fallthru
      _
    // Predicated region
    $region22: #{tpu_custom_call.1} parent=1 // pred_check
      _
    $region23: #{tpu_custom_call.1} parent=1 // pred_check_branch
      %49 = sbr.rel (0) target = $region25
    $region24: #{tpu_custom_call.1} parent=1 // pred_region
      _
    $region25: #{tpu_custom_call.1} parent=1 // pred_fallthru
      _
    // Predicated region
    $region26: #{tpu_custom_call.1} parent=1 // pred_check
      _
    $region27: #{tpu_custom_call.1} parent=1 // pred_check_branch
      %51 = sbr.rel (0) target = $region29
    $region28: #{tpu_custom_call.1} parent=1 // pred_region
      %52 = dma.done [#allocation4], 512
    $region29: #{tpu_custom_call.1} parent=1 // pred_fallthru
      _
    // Predicated region
    $region30: #{tpu_custom_call.1} parent=1 // pred_check
      _
    $region31: #{tpu_custom_call.1} parent=1 // pred_check_branch
      %54 = sbr.rel (0) target = $region33
    $region32: #{tpu_custom_call.1} parent=1 // pred_region
      %55 = dma.done [#allocation7], 2048
    $region33: #{tpu_custom_call.1} parent=1 // pred_fallthru
      _
    %p56 = scmp.eq.s32.totalorder 0, 0
    // Predicated region
    $region34: #{tpu_custom_call.1} parent=1 // pred_check
      %p57 = pneg %p56
    $region35: #{tpu_custom_call.1} parent=1 // pred_check_branch
      %59 = sbr.rel (%p57) target = $region37
    $region36: #{tpu_custom_call.1} parent=1 // pred_region
      %60 = vst [vmem:[#allocation9] sm:$0xff] 0.0
      %61 = vst [vmem:[#allocation11] sm:$0xff] 0.0
    $region37: #{tpu_custom_call.1} parent=1 // pred_fallthru
      _
    %v62 = vld [vmem:[#allocation3] sm:$0xf]
    %v63 = vld [vmem:[#allocation3 + $0x4] sm:$0xf]
    %v64 = vld [vmem:[#allocation3 + $0x8] sm:$0xf]
    %v65 = vld [vmem:[#allocation3 + $0xc] sm:$0xf]
    %v66 = vld [vmem:[#allocation3 + $0x10] sm:$0xf]
    %v67 = vld [vmem:[#allocation3 + $0x14] sm:$0xf]
    %v68 = vld [vmem:[#allocation3 + $0x18] sm:$0xf]
    %v69 = vld [vmem:[#allocation3 + $0x1c] sm:$0xf]
    %v70 = vunpack.c.l.bf16 %v62
    %v71 = vunpack.c.l.bf16 %v63
    %v72 = vunpack.c.l.bf16 %v64
    %v73 = vunpack.c.l.bf16 %v65
    %v74 = vunpack.c.l.bf16 %v66
    %v75 = vunpack.c.l.bf16 %v67
    %v76 = vunpack.c.l.bf16 %v68
    %v77 = vunpack.c.l.bf16 %v69
    %v78 = vld [vmem:[#allocation6] sm:$0xff]
    %v79 = vld [vmem:[#allocation6 + $0x8] sm:$0xff]
    %v80 = vld [vmem:[#allocation6 + $0x10] sm:$0xff]
    %v81 = vld [vmem:[#allocation6 + $0x18] sm:$0xff]
    %v82 = vld [vmem:[#allocation6 + $0x20] sm:$0xff]
    %v83 = vld [vmem:[#allocation6 + $0x28] sm:$0xff]
    %v84 = vld [vmem:[#allocation6 + $0x30] sm:$0xff]
    %v85 = vld [vmem:[#allocation6 + $0x38] sm:$0xff]
    %v86 = vld [vmem:[#allocation6 + $0x40] sm:$0xff]
    %v87 = vld [vmem:[#allocation6 + $0x48] sm:$0xff]
    %v88 = vld [vmem:[#allocation6 + $0x50] sm:$0xff]
    %v89 = vld [vmem:[#allocation6 + $0x58] sm:$0xff]
    %v90 = vld [vmem:[#allocation6 + $0x60] sm:$0xff]
    %v91 = vld [vmem:[#allocation6 + $0x68] sm:$0xff]
    %v92 = vld [vmem:[#allocation6 + $0x70] sm:$0xff]
    %v93 = vld [vmem:[#allocation6 + $0x78] sm:$0xff]
    %94 = vmatprep.subr.mxu0 0.0
    %95 = vmatpush1.msra.mxu0 %v93
    %96 = vmatprep.subr.mxu0 0.0
    %97 = vmatpush1.msra.mxu0 %v92
    %98 = vmatprep.subr.mxu0 0.0
    %99 = vmatpush1.msra.mxu0 %v91
    %100 = vmatprep.subr.mxu0 0.0
    %101 = vmatpush1.msra.mxu0 %v90
    %102 = vmatprep.subr.mxu0 0.0
    %103 = vmatpush1.msra.mxu0 %v89
    %104 = vmatprep.subr.mxu0 0.0
    %105 = vmatpush1.msra.mxu0 %v88
    %106 = vmatprep.subr.mxu0 0.0
    %107 = vmatpush1.msra.mxu0 %v87
    %108 = vmatprep.subr.mxu0 0.0
    %109 = vmatpush1.msra.mxu0 %v86
    %110 = vmatprep.subr.mxu0 0.0
    %111 = vmatpush1.msra.mxu0 %v85
    %112 = vmatprep.subr.mxu0 0.0
    %113 = vmatpush1.msra.mxu0 %v84
    %114 = vmatprep.subr.mxu0 0.0
    %115 = vmatpush1.msra.mxu0 %v83
    %116 = vmatprep.subr.mxu0 0.0
    %117 = vmatpush1.msra.mxu0 %v82
    %118 = vmatprep.subr.mxu0 0.0
    %119 = vmatpush1.msra.mxu0 %v81
    %120 = vmatprep.subr.mxu0 0.0
    %121 = vmatpush1.msra.mxu0 %v80
    %122 = vmatprep.subr.mxu0 0.0
    %123 = vmatpush1.msra.mxu0 %v79
    %124 = vmatprep.subr.mxu0 0.0
    %125 = vmatpush1.msra.mxu0 %v78
    %126 = vmatprep.subr.mxu0 0.0
    %127 = vmatpush2.msra.mxu0 0.0
    %128 = vmatprep.subr.mxu0 0.0
    %129 = vmatpush2.msra.mxu0 0.0
    %130 = vmatprep.subr.mxu0 0.0
    %131 = vmatpush2.msra.mxu0 0.0
    %132 = vmatprep.subr.mxu0 0.0
    %133 = vmatpush2.msra.mxu0 0.0
    %134 = vmatprep.subr.mxu0 0.0
    %135 = vmatpush2.msra.mxu0 0.0
    %136 = vmatprep.subr.mxu0 0.0
    %137 = vmatpush2.msra.mxu0 0.0
    %138 = vmatprep.subr.mxu0 0.0
    %139 = vmatpush2.msra.mxu0 0.0
    %140 = vmatprep.subr.mxu0 0.0
    %141 = vmatpush2.msra.mxu0 0.0
    %142 = vmatprep.subr.mxu0 0.0
    %143 = vmatpush2.msra.mxu0 0.0
    %144 = vmatprep.subr.mxu0 0.0
    %145 = vmatpush2.msra.mxu0 0.0
    %146 = vmatprep.subr.mxu0 0.0
    %147 = vmatpush2.msra.mxu0 0.0
    %148 = vmatprep.subr.mxu0 0.0
    %149 = vmatpush2.msra.mxu0 0.0
    %150 = vmatprep.subr.mxu0 0.0
    %151 = vmatpush2.msra.mxu0 0.0
    %152 = vmatprep.subr.mxu0 0.0
    %153 = vmatpush2.msra.mxu0 0.0
    %154 = vmatprep.subr.mxu0 0.0
    %155 = vmatpush2.msra.mxu0 0.0
    %156 = vmatprep.subr.mxu0 0.0
    %157 = vmatpush2.msra.mxu0 0.0
    %158 = vmatprep.mubr.f32.mxu0 0.0
    %159 = vmatmul.mubr.f32.gmra.mxu0 %v70
    %v160 = vpop.f32.mrf.mxu0
    %v161 = vadd.f32 0.0, %v160
    %v162 = vpop.f32.mrf.mxu0
    %163 = vmatprep.mubr.f32.mxu0 0.0
    %164 = vmatmul.mubr.f32.gmra.mxu0 %v71
    %v165 = vpop.f32.mrf.mxu0
    %v166 = vadd.f32 0.0, %v165
    %v167 = vpop.f32.mrf.mxu0
    %168 = vmatprep.mubr.f32.mxu0 0.0
    %169 = vmatmul.mubr.f32.gmra.mxu0 %v72
    %v170 = vpop.f32.mrf.mxu0
    %v171 = vadd.f32 0.0, %v170
    %v172 = vpop.f32.mrf.mxu0
    %173 = vmatprep.mubr.f32.mxu0 0.0
    %174 = vmatmul.mubr.f32.gmra.mxu0 %v73
    %v175 = vpop.f32.mrf.mxu0
    %v176 = vadd.f32 0.0, %v175
    %v177 = vpop.f32.mrf.mxu0
    %178 = vmatprep.mubr.f32.mxu0 0.0
    %179 = vmatmul.mubr.f32.gmra.mxu0 %v74
    %v180 = vpop.f32.mrf.mxu0
    %v181 = vadd.f32 0.0, %v180
    %v182 = vpop.f32.mrf.mxu0
    %183 = vmatprep.mubr.f32.mxu0 0.0
    %184 = vmatmul.mubr.f32.gmra.mxu0 %v75
    %v185 = vpop.f32.mrf.mxu0
    %v186 = vadd.f32 0.0, %v185
    %v187 = vpop.f32.mrf.mxu0
    %188 = vmatprep.mubr.f32.mxu0 0.0
    %189 = vmatmul.mubr.f32.gmra.mxu0 %v76
    %v190 = vpop.f32.mrf.mxu0
    %v191 = vadd.f32 0.0, %v190
    %v192 = vpop.f32.mrf.mxu0
    %193 = vmatprep.mubr.f32.mxu0 0.0
    %194 = vmatmul.mubr.f32.gmra.mxu0 %v77
    %v195 = vpop.f32.mrf.mxu0
    %v196 = vadd.f32 0.0, %v195
    %v197 = vpop.f32.mrf.mxu0
    %198 = vdwg.mxu0
    %199 = vst [vmem:[#allocation2] sm:$0xff] %v161
    %200 = vst [vmem:[#allocation2 + $0x8] sm:$0xff] %v166
    %201 = vst [vmem:[#allocation2 + $0x10] sm:$0xff] %v171
    %202 = vst [vmem:[#allocation2 + $0x18] sm:$0xff] %v176
    %203 = vst [vmem:[#allocation2 + $0x20] sm:$0xff] %v181
    %204 = vst [vmem:[#allocation2 + $0x28] sm:$0xff] %v186
    %205 = vst [vmem:[#allocation2 + $0x30] sm:$0xff] %v191
    %206 = vst [vmem:[#allocation2 + $0x38] sm:$0xff] %v196
    %v207 = vld [vmem:[%s2] sm:$0x1]
    %v208 = vld [vmem:[%s3] sm:$0x1]
    %v209 = vld [vmem:[%s4] sm:$0x1]
    %v210 = vld [vmem:[%s5] sm:$0x1]
    %v211 = vld [vmem:[#allocation9] sm:$0xff]
    %v212 = vld [vmem:[#allocation11] sm:$0xff]
    %v213 = vld [vmem:[#allocation2] sm:$0xff]
    %v215 = vlaneseq
    %v216 = vshrl.u32 %v215, 7
    %v217 = vsub.s32 0, %v216
    %v218 = vrot.slane %v207, %v217
    %v220 = vadd.f32 %v213, %v218
    %v222 = vlaneseq
    %v223 = vshrl.u32 %v222, 7
    %v224 = vsub.s32 0, %v223
    %v225 = vrot.slane %v208, %v224
    %v227 = vmul.f32 %v211, %v225
    %v228 = vadd.f32 %v227, %v220
    %v229 = vsub.f32 %v228, %v212
    %vm230 = vcmp.gt.f32.partialorder %v229, 1.0
    %v231 = vsel %vm230, 1.0, 0.0
    %v233 = vlaneseq
    %v234 = vshrl.u32 %v233, 7
    %v235 = vsub.s32 0, %v234
    %v236 = vrot.slane %v209, %v235
    %v238 = vmul.f32 %v212, %v236
    %v240 = vlaneseq
    %v241 = vshrl.u32 %v240, 7
    %v242 = vsub.s32 0, %v241
    %v243 = vrot.slane %v210, %v242
    %v245 = vmul.f32 %v231, %v243
    %v246 = vadd.f32 %v238, %v245
    %v247 = vpack.c.bf16 %v231, %v231
    %248 = vst [vmem:[#allocation8] sm:$0xf] %v247
    %s249 = scalar_lea.vmem [#allocation2], 8
    %v250 = vld [vmem:[%s249] sm:$0xff]
    %v251 = vadd.f32 %v250, %v218
    %v252 = vmul.f32 %v229, %v225
    %v253 = vadd.f32 %v252, %v251
    %v254 = vsub.f32 %v253, %v246
    %vm255 = vcmp.gt.f32.partialorder %v254, 1.0
    %v256 = vsel %vm255, 1.0, 0.0
    %v257 = vmul.f32 %v246, %v236
    %v258 = vmul.f32 %v256, %v243
    %v259 = vadd.f32 %v257, %v258
    %v260 = vpack.c.bf16 %v256, %v256
    %s261 = scalar_lea.vmem [#allocation8], 4
    %262 = vst [vmem:[%s261] sm:$0xf] %v260
    %s263 = scalar_lea.vmem [#allocation2], 16
    %v264 = vld [vmem:[%s263] sm:$0xff]
    %v265 = vadd.f32 %v264, %v218
    %v266 = vmul.f32 %v254, %v225
    %v267 = vadd.f32 %v266, %v265
    %v268 = vsub.f32 %v267, %v259
    %vm269 = vcmp.gt.f32.partialorder %v268, 1.0
    %v270 = vsel %vm269, 1.0, 0.0
    %v271 = vmul.f32 %v259, %v236
    %v272 = vmul.f32 %v270, %v243
    %v273 = vadd.f32 %v271, %v272
    %v274 = vpack.c.bf16 %v270, %v270
    %s275 = scalar_lea.vmem [#allocation8], 8
    %276 = vst [vmem:[%s275] sm:$0xf] %v274
    %s277 = scalar_lea.vmem [#allocation2], 24
    %v278 = vld [vmem:[%s277] sm:$0xff]
    %v279 = vadd.f32 %v278, %v218
    %v280 = vmul.f32 %v268, %v225
    %v281 = vadd.f32 %v280, %v279
    %v282 = vsub.f32 %v281, %v273
    %vm283 = vcmp.gt.f32.partialorder %v282, 1.0
    %v284 = vsel %vm283, 1.0, 0.0
    %v285 = vmul.f32 %v273, %v236
    %v286 = vmul.f32 %v284, %v243
    %v287 = vadd.f32 %v285, %v286
    %v288 = vpack.c.bf16 %v284, %v284
    %s289 = scalar_lea.vmem [#allocation8], 12
    %290 = vst [vmem:[%s289] sm:$0xf] %v288
    %s291 = scalar_lea.vmem [#allocation2], 32
    %v292 = vld [vmem:[%s291] sm:$0xff]
    %v293 = vadd.f32 %v292, %v218
    %v294 = vmul.f32 %v282, %v225
    %v295 = vadd.f32 %v294, %v293
    %v296 = vsub.f32 %v295, %v287
    %vm297 = vcmp.gt.f32.partialorder %v296, 1.0
    %v298 = vsel %vm297, 1.0, 0.0
    %v299 = vmul.f32 %v287, %v236
    %v300 = vmul.f32 %v298, %v243
    %v301 = vadd.f32 %v299, %v300
    %v302 = vpack.c.bf16 %v298, %v298
    %s303 = scalar_lea.vmem [#allocation8], 16
    %304 = vst [vmem:[%s303] sm:$0xf] %v302
    %s305 = scalar_lea.vmem [#allocation2], 40
    %v306 = vld [vmem:[%s305] sm:$0xff]
    %v307 = vadd.f32 %v306, %v218
    %v308 = vmul.f32 %v296, %v225
    %v309 = vadd.f32 %v308, %v307
    %v310 = vsub.f32 %v309, %v301
    %vm311 = vcmp.gt.f32.partialorder %v310, 1.0
    %v312 = vsel %vm311, 1.0, 0.0
    %v313 = vmul.f32 %v301, %v236
    %v314 = vmul.f32 %v312, %v243
    %v315 = vadd.f32 %v313, %v314
    %v316 = vpack.c.bf16 %v312, %v312
    %s317 = scalar_lea.vmem [#allocation8], 20
    %318 = vst [vmem:[%s317] sm:$0xf] %v316
    %s319 = scalar_lea.vmem [#allocation2], 48
    %v320 = vld [vmem:[%s319] sm:$0xff]
    %v321 = vadd.f32 %v320, %v218
    %v322 = vmul.f32 %v310, %v225
    %v323 = vadd.f32 %v322, %v321
    %v324 = vsub.f32 %v323, %v315
    %vm325 = vcmp.gt.f32.partialorder %v324, 1.0
    %v326 = vsel %vm325, 1.0, 0.0
    %v327 = vmul.f32 %v315, %v236
    %v328 = vmul.f32 %v326, %v243
    %v329 = vadd.f32 %v327, %v328
    %v330 = vpack.c.bf16 %v326, %v326
    %s331 = scalar_lea.vmem [#allocation8], 24
    %332 = vst [vmem:[%s331] sm:$0xf] %v330
    %s333 = scalar_lea.vmem [#allocation2], 56
    %v334 = vld [vmem:[%s333] sm:$0xff]
    %v335 = vadd.f32 %v334, %v218
    %v336 = vmul.f32 %v324, %v225
    %v337 = vadd.f32 %v336, %v335
    %v338 = vsub.f32 %v337, %v329
    %vm339 = vcmp.gt.f32.partialorder %v338, 1.0
    %v340 = vsel %vm339, 1.0, 0.0
    %v341 = vmul.f32 %v329, %v236
    %v342 = vmul.f32 %v340, %v243
    %v343 = vadd.f32 %v341, %v342
    %v344 = vpack.c.bf16 %v340, %v340
    %s345 = scalar_lea.vmem [#allocation8], 28
    %346 = vst [vmem:[%s345] sm:$0xf] %v344
    %347 = vst [vmem:[#allocation9] sm:$0xff] %v338
    %348 = vst [vmem:[#allocation11] sm:$0xff] %v343
    // Predicated region
    $region38: #{tpu_custom_call.1} parent=1 // pred_check
      _
    $region39: #{tpu_custom_call.1} parent=1 // pred_check_branch
      %350 = sbr.rel (0) target = $region41
    $region40: #{tpu_custom_call.1} parent=1 // pred_region
      %s352 = ssub.s32 512, 512
      %353 = vsyncadd [#allocation5], %s352
      %s354 = sshll.u32 [#allocation8], 4
      %s355 = int_to_ptr.vmem [resolvable:$true] %s354
      %360 = dma.vmem_to_hbm [thread:$0]  %s355, 512, %s6, [#allocation5], 64, 64, 4
    $region41: #{tpu_custom_call.1} parent=1 // pred_fallthru
      _
    // Predicated region
    $region42: #{tpu_custom_call.1} parent=1 // pred_check
      _
    $region43: #{tpu_custom_call.1} parent=1 // pred_check_branch
      %362 = sbr.rel (0) target = $region45
    $region44: #{tpu_custom_call.1} parent=1 // pred_region
      %s364 = ssub.s32 128, 128
      %365 = vsyncadd [#allocation10], %s364
      %s367 = sshll.u32 [#allocation9], 4
      %s368 = int_to_ptr.vmem [resolvable:$true] %s367
      %370 = dma.vmem_to_hbm [thread:$0]  %s368, 128, %s7, [#allocation10]
    $region45: #{tpu_custom_call.1} parent=1 // pred_fallthru
      _
    // Predicated region
    $region46: #{tpu_custom_call.1} parent=1 // pred_check
      _
    $region47: #{tpu_custom_call.1} parent=1 // pred_check_branch
      %372 = sbr.rel (0) target = $region49
    $region48: #{tpu_custom_call.1} parent=1 // pred_region
      %s374 = ssub.s32 128, 128
      %375 = vsyncadd [#allocation10], %s374
      %s377 = sshll.u32 [#allocation11], 4
      %s378 = int_to_ptr.vmem [resolvable:$true] %s377
      %380 = dma.vmem_to_hbm [thread:$0]  %s378, 128, %s8, [#allocation10]
    $region49: #{tpu_custom_call.1} parent=1 // pred_fallthru
      _
    // Predicated region
    $region50: #{tpu_custom_call.1} parent=1 // pred_check
      _
    $region51: #{tpu_custom_call.1} parent=1 // pred_check_branch
      %382 = sbr.rel (0) target = $region53
    $region52: #{tpu_custom_call.1} parent=1 // pred_region
      %383 = dma.done [#allocation5], 512
    $region53: #{tpu_custom_call.1} parent=1 // pred_fallthru
      _
    // Predicated region
    $region54: #{tpu_custom_call.1} parent=1 // pred_check
      _
    $region55: #{tpu_custom_call.1} parent=1 // pred_check_branch
      %385 = sbr.rel (0) target = $region57
    $region56: #{tpu_custom_call.1} parent=1 // pred_region
      %386 = dma.done [#allocation10], 128
    $region57: #{tpu_custom_call.1} parent=1 // pred_fallthru
      _
    // Predicated region
    $region58: #{tpu_custom_call.1} parent=1 // pred_check
      _
    $region59: #{tpu_custom_call.1} parent=1 // pred_check_branch
      %388 = sbr.rel (0) target = $region61
    $region60: #{tpu_custom_call.1} parent=1 // pred_region
      %389 = dma.done [#allocation10], 128
    $region61: #{tpu_custom_call.1} parent=1 // pred_fallthru
      _
    %390 = vsyncpa [#allocation4], 1
    %391 = vsyncpa [#allocation7], 1
    %392 = vsyncpa [#allocation5], 1
    %393 = vsyncpa [#allocation10], 1

</llo_original>
